<compile_context>
chip_gen: v7x
topology: tpu7x:2x2x1
jax: 0.10.0
libtpu: 0.0.40
codegen_flags: <defaults>
</compile_context>

<pallas_src>
import math
import jax
import jax.numpy as jnp
from jax.experimental import pallas as pl
from jax.experimental.pallas import tpu as pltpu

HID = 128       # padded hidden width (all trunk activations occupy full 128 lanes)
HEAD_PAD = 128  # lane-dense fused head output width (mu | sigma | AC_prob | zeros)


def _round_up(a, b):
    return (a + b - 1) // b * b


def actor_kernel(x_ref,
                 w1_ref, b1_ref, w2_ref, b2_ref, w3_ref, b3_ref, w4_ref, b4_ref,
                 wh_ref, bh_ref,
                 out_ref):
    cdt = w1_ref.dtype  # MXU feed dtype (bf16 on the perf path, f32 on the strict path)
    bf16_path = jnp.dtype(cdt) == jnp.dtype(jnp.bfloat16)
    # On the bf16 path, do the tanh/sigmoid in bf16 (EUP-bound on v6e/v7x); the
    # result then feeds the next matmul with no extra cast. f32 path stays exact.
    act_dt = jnp.bfloat16 if bf16_path else jnp.float32

    def layer(h, w_ref, b_ref, act):
        y = jnp.dot(h.astype(cdt), w_ref[...], preferred_element_type=jnp.float32)
        return act((y + b_ref[...]).astype(act_dt))

    h = layer(x_ref[...], w1_ref, b1_ref, jnp.tanh)     # trunk: 4x (Linear + Tanh)
    h = layer(h, w2_ref, b2_ref, jnp.tanh)
    h = layer(h, w3_ref, b3_ref, jnp.tanh)
    h = layer(h, w4_ref, b4_ref, jnp.tanh)
    # fused heads: one MXU push, one sigmoid, one lane-dense (128-wide) store
    out = layer(h, wh_ref, bh_ref, jax.nn.sigmoid)
    out_ref[...] = out.astype(out_ref.dtype)


def prepare_actor_params(params, num_actions, num_AC, *, compute_dtype=jnp.bfloat16):
    """Pad hidden dims to 128, fuse the three heads into one lane-dense [128,128]
    weight, and cast weights to `compute_dtype` for the MXU (biases stay f32)."""
    w1, b1, w2, b2, w3, b3, w4, b4, wmu, bmu, wsig, bsig, wac, bac = params

    def pad_to(a, rows, cols):
        return jnp.pad(a, ((0, rows - a.shape[0]), (0, cols - a.shape[1])))

    num_obs = w1.shape[0]
    w1p, b1p = pad_to(w1, num_obs, HID), pad_to(b1, 1, HID)
    w2p, b2p = pad_to(w2, HID, HID),     pad_to(b2, 1, HID)
    w3p, b3p = pad_to(w3, HID, HID),     pad_to(b3, 1, HID)
    w4p, b4p = pad_to(w4, HID, HID),     pad_to(b4, 1, HID)

    head_width = 2 * num_actions + num_AC
    assert head_width <= HEAD_PAD, "fused head wider than the 128-lane slab"
    head_w = jnp.concatenate([wmu, wsig, wac], axis=1)   # [64, 2A+C]
    head_b = jnp.concatenate([bmu, bsig, bac], axis=1)   # [1, 2A+C]
    whp = pad_to(head_w, HID, HEAD_PAD)
    bhp = pad_to(head_b, 1, HEAD_PAD)

    cdt = compute_dtype
    return (w1p.astype(cdt), b1p, w2p.astype(cdt), b2p,
            w3p.astype(cdt), b3p, w4p.astype(cdt), b4p,
            whp.astype(cdt), bhp)


def actor_forward(x, prepared_params, num_actions, num_AC, *,
                  tile_n=2048, min_grid_steps=4):
    """x: [N, num_observations] f32. Returns (mu, sigma, AC_prob) as f32."""
    weights = tuple(prepared_params)
    N, num_obs = x.shape

    bf16_path = jnp.dtype(weights[0].dtype) == jnp.dtype(jnp.bfloat16)
    out_dtype = jnp.bfloat16 if bf16_path else jnp.float32

    # Batch tile: multiple of 32 rows (clean bf16 sublane packing), capped at tile_n,
    # and small enough that the grid has >= min_grid_steps steps when N is large
    # (so "parallel" semantics can shard across v7x's two TensorCores). Floor of 256
    # rows keeps per-step grid overhead amortized on 1-TC chips.
    tn = _round_up(min(tile_n, max(N, 32)), 32)
    tn_cap = max(256, _round_up(pl.cdiv(max(N, 1), min_grid_steps), 32))
    tn = max(32, min(tn, tn_cap))
    n_pad = _round_up(N, tn)
    if n_pad != N:
        x = jnp.pad(x, ((0, n_pad - N), (0, 0)))
    grid = (n_pad // tn,)

    def const_spec(arr):
        # Full-array block, constant block index -> stays VMEM-resident across steps.
        # (Optionally pipeline_mode=pl.Buffered(1) to drop the duplicate ~140 KB
        #  buffer set; omitted here as it is a <1% VMEM saving.)
        return pl.BlockSpec(arr.shape, lambda i: (0, 0))

    in_specs = [pl.BlockSpec((tn, num_obs), lambda i: (i, 0))]
    in_specs += [const_spec(w) for w in weights]

    weight_bytes = sum(int(w.size) * w.dtype.itemsize for w in weights)
    out_isz = jnp.dtype(out_dtype).itemsize

    flops = 2 * n_pad * (num_obs * HID + 3 * HID * HID + HID * HEAD_PAD)
    transcendentals = n_pad * (4 * HID + HEAD_PAD)
    bytes_accessed = int(n_pad * num_obs * x.dtype.itemsize
                         + weight_bytes
                         + n_pad * HEAD_PAD * out_isz)

    # Explicit VMEM budget (double-buffered x/out + resident weights + headroom for
    # compiler-materialized [tn,128] intermediates). Capped well below v7x's 64 MiB.
    vmem_need = (2 * tn * num_obs * x.dtype.itemsize
                 + 2 * tn * HEAD_PAD * out_isz
                 + 2 * weight_bytes
                 + 8 * tn * HID * 4)
    vmem_limit = int(min(max(2 * vmem_need, 16 << 20), 48 << 20))

    out = pl.pallas_call(
        actor_kernel,
        out_shape=jax.ShapeDtypeStruct((n_pad, HEAD_PAD), out_dtype),
        grid=grid,
        in_specs=in_specs,
        out_specs=pl.BlockSpec((tn, HEAD_PAD), lambda i: (i, 0)),
        compiler_params=pltpu.CompilerParams(
            dimension_semantics=("parallel",),
            vmem_limit_bytes=vmem_limit),
        cost_estimate=pl.CostEstimate(flops=flops,
                                      transcendentals=transcendentals,
                                      bytes_accessed=bytes_accessed),
    )(x, *weights)

    mu = out[:N, :num_actions].astype(jnp.float32)
    sigma = out[:N, num_actions:2 * num_actions].astype(jnp.float32)
    prob = out[:N, 2 * num_actions:2 * num_actions + num_AC].astype(jnp.float32)
    return mu, sigma, prob


def _orthogonal(key, shape, gain):
    # Matches torch.nn.init.orthogonal_ semantics (deterministic given key).
    return jax.nn.initializers.orthogonal(scale=gain)(key, shape, jnp.float32)


def make_params(key, num_observations, num_actions, num_AC):
    """Unpadded params in [in, out] layout (PyTorch weights transposed), zero biases."""
    gain = math.sqrt(2.0)
    sizes = [
        (num_observations, 64),  # hiden.0
        (64, 128),               # hiden.2
        (128, 128),              # hiden.4
        (128, 64),               # hiden.6
        (64, num_actions),       # mu.0
        (64, num_actions),       # sigma.0
        (64, num_AC),            # AC_prob.0
    ]
    params = []
    keys = jax.random.split(key, len(sizes))
    for k, (fin, fout) in zip(keys, sizes):
        w_pt = _orthogonal(k, (fout, fin), gain)   # PyTorch [out, in]
        params.append(jnp.asarray(w_pt.T))         # -> [in, out]
        params.append(jnp.zeros((1, fout), jnp.float32))
    return params


def actor_reference(x, params):
    # Pure-JAX f32 reference (exact semantics of the PyTorch module).
    w1, b1, w2, b2, w3, b3, w4, b4, wmu, bmu, wsig, bsig, wac, bac = params
    h = jnp.tanh(x @ w1 + b1)
    h = jnp.tanh(h @ w2 + b2)
    h = jnp.tanh(h @ w3 + b3)
    h = jnp.tanh(h @ w4 + b4)
    return (jax.nn.sigmoid(h @ wmu + bmu),
            jax.nn.sigmoid(h @ wsig + bsig),
            jax.nn.sigmoid(h @ wac + bac))


if __name__ == "__main__":
    num_observations = 32
    num_actions = 4
    num_AC = 3
    batch = 8

    key = jax.random.PRNGKey(0)
    k_x, k_p = jax.random.split(key)
    x = jax.random.normal(k_x, (batch, num_observations), jnp.float32)
    params = make_params(k_p, num_observations, num_actions, num_AC)
    mu_r, sigma_r, prob_r = actor_reference(x, params)

    # 1) strict-semantics check: f32 MXU feed, f32 activations, f32 output
    p_f32 = prepare_actor_params(params, num_actions, num_AC, compute_dtype=jnp.float32)
    mu, sigma, prob = actor_forward(x, p_f32, num_actions, num_AC)
    jax.block_until_ready((mu, sigma, prob))
    assert mu.shape == (batch, num_actions)
    assert sigma.shape == (batch, num_actions)
    assert prob.shape == (batch, num_AC)
    assert jnp.allclose(mu, mu_r, atol=1e-5)
    assert jnp.allclose(sigma, sigma_r, atol=1e-5)
    assert jnp.allclose(prob, prob_r, atol=1e-5)

    # 2) performance-path check: bf16 MXU feed + bf16 EUP + bf16 output (f32 acc)
    p_bf16 = prepare_actor_params(params, num_actions, num_AC, compute_dtype=jnp.bfloat16)
    mu_b, sigma_b, prob_b = actor_forward(x, p_bf16, num_actions, num_AC)
    jax.block_until_ready((mu_b, sigma_b, prob_b))
    assert jnp.allclose(mu_b, mu_r, atol=7.5e-2)
    assert jnp.allclose(sigma_b, sigma_r, atol=7.5e-2)
    assert jnp.allclose(prob_b, prob_r, atol=7.5e-2)

    print("KERNEL_OK")
</pallas_src>

<mosaic_0001>
module attributes {stable_mosaic.version = 11 : i64} {
  func.func @actor_kernel(%arg0: i32, %arg1: memref<32x32xf32, #tpu.memory_space<vmem>>, %arg2: memref<32x128xf32, #tpu.memory_space<vmem>>, %arg3: memref<1x128xf32, #tpu.memory_space<vmem>>, %arg4: memref<128x128xf32, #tpu.memory_space<vmem>>, %arg5: memref<1x128xf32, #tpu.memory_space<vmem>>, %arg6: memref<128x128xf32, #tpu.memory_space<vmem>>, %arg7: memref<1x128xf32, #tpu.memory_space<vmem>>, %arg8: memref<128x128xf32, #tpu.memory_space<vmem>>, %arg9: memref<1x128xf32, #tpu.memory_space<vmem>>, %arg10: memref<128x128xf32, #tpu.memory_space<vmem>>, %arg11: memref<1x128xf32, #tpu.memory_space<vmem>>, %arg12: memref<32x128xf32, #tpu.memory_space<vmem>>) attributes {dimension_semantics = [#tpu.dimension_semantics<parallel>], iteration_bounds = array<i64: 1>, scalar_prefetch = 0 : i64, scratch_operands = 0 : i64, tpu.core_type = #tpu.core_type<tc>, window_params = [{transform_indices = @transform_0, window_bounds = array<i64: 32, 32>}, {pipeline_mode = #tpu.pipeline_mode<synchronous>, transform_indices = @transform_1, window_bounds = array<i64: 32, 128>}, {pipeline_mode = #tpu.pipeline_mode<synchronous>, transform_indices = @transform_2, window_bounds = array<i64: 1, 128>}, {pipeline_mode = #tpu.pipeline_mode<synchronous>, transform_indices = @transform_3, window_bounds = array<i64: 128, 128>}, {pipeline_mode = #tpu.pipeline_mode<synchronous>, transform_indices = @transform_4, window_bounds = array<i64: 1, 128>}, {pipeline_mode = #tpu.pipeline_mode<synchronous>, transform_indices = @transform_5, window_bounds = array<i64: 128, 128>}, {pipeline_mode = #tpu.pipeline_mode<synchronous>, transform_indices = @transform_6, window_bounds = array<i64: 1, 128>}, {pipeline_mode = #tpu.pipeline_mode<synchronous>, transform_indices = @transform_7, window_bounds = array<i64: 128, 128>}, {pipeline_mode = #tpu.pipeline_mode<synchronous>, transform_indices = @transform_8, window_bounds = array<i64: 1, 128>}, {pipeline_mode = #tpu.pipeline_mode<synchronous>, transform_indices = @transform_9, window_bounds = array<i64: 128, 128>}, {pipeline_mode = #tpu.pipeline_mode<synchronous>, transform_indices = @transform_10, window_bounds = array<i64: 1, 128>}, {transform_indices = @transform_11, window_bounds = array<i64: 32, 128>}]} {
    %c0 = arith.constant 0 : index
    %c0_0 = arith.constant 0 : index
    %0 = vector.load %arg1[%c0, %c0_0] : memref<32x32xf32, #tpu.memory_space<vmem>>, vector<32x32xf32>
    %c0_1 = arith.constant 0 : index
    %c0_2 = arith.constant 0 : index
    %1 = vector.load %arg2[%c0_1, %c0_2] : memref<32x128xf32, #tpu.memory_space<vmem>>, vector<32x128xf32>
    %cst = arith.constant dense<0.000000e+00> : vector<32x128xf32>
    %2 = tpu.matmul %0, %1, %cst {dimension_numbers = #tpu.dot_dimension_numbers<[1], [0], [0], [1], [0, 0, 1, 1], [], []>} : vector<32x32xf32>, vector<32x128xf32>, vector<32x128xf32> -> vector<32x128xf32>
    %c0_3 = arith.constant 0 : index
    %c0_4 = arith.constant 0 : index
    %3 = vector.load %arg3[%c0_3, %c0_4] : memref<1x128xf32, #tpu.memory_space<vmem>>, vector<1x128xf32>
    %4 = vector.broadcast %3 : vector<1x128xf32> to vector<32x128xf32>
    %5 = arith.addf %2, %4 : vector<32x128xf32>
    %6 = math.tanh %5 : vector<32x128xf32>
    %c0_5 = arith.constant 0 : index
    %c0_6 = arith.constant 0 : index
    %7 = vector.load %arg4[%c0_5, %c0_6] : memref<128x128xf32, #tpu.memory_space<vmem>>, vector<128x128xf32>
    %cst_7 = arith.constant dense<0.000000e+00> : vector<32x128xf32>
    %8 = tpu.matmul %6, %7, %cst_7 {dimension_numbers = #tpu.dot_dimension_numbers<[1], [0], [0], [1], [0, 0, 1, 1], [], []>} : vector<32x128xf32>, vector<128x128xf32>, vector<32x128xf32> -> vector<32x128xf32>
    %c0_8 = arith.constant 0 : index
    %c0_9 = arith.constant 0 : index
    %9 = vector.load %arg5[%c0_8, %c0_9] : memref<1x128xf32, #tpu.memory_space<vmem>>, vector<1x128xf32>
    %10 = vector.broadcast %9 : vector<1x128xf32> to vector<32x128xf32>
    %11 = arith.addf %8, %10 : vector<32x128xf32>
    %12 = math.tanh %11 : vector<32x128xf32>
    %c0_10 = arith.constant 0 : index
    %c0_11 = arith.constant 0 : index
    %13 = vector.load %arg6[%c0_10, %c0_11] : memref<128x128xf32, #tpu.memory_space<vmem>>, vector<128x128xf32>
    %cst_12 = arith.constant dense<0.000000e+00> : vector<32x128xf32>
    %14 = tpu.matmul %12, %13, %cst_12 {dimension_numbers = #tpu.dot_dimension_numbers<[1], [0], [0], [1], [0, 0, 1, 1], [], []>} : vector<32x128xf32>, vector<128x128xf32>, vector<32x128xf32> -> vector<32x128xf32>
    %c0_13 = arith.constant 0 : index
    %c0_14 = arith.constant 0 : index
    %15 = vector.load %arg7[%c0_13, %c0_14] : memref<1x128xf32, #tpu.memory_space<vmem>>, vector<1x128xf32>
    %16 = vector.broadcast %15 : vector<1x128xf32> to vector<32x128xf32>
    %17 = arith.addf %14, %16 : vector<32x128xf32>
    %18 = math.tanh %17 : vector<32x128xf32>
    %c0_15 = arith.constant 0 : index
    %c0_16 = arith.constant 0 : index
    %19 = vector.load %arg8[%c0_15, %c0_16] : memref<128x128xf32, #tpu.memory_space<vmem>>, vector<128x128xf32>
    %cst_17 = arith.constant dense<0.000000e+00> : vector<32x128xf32>
    %20 = tpu.matmul %18, %19, %cst_17 {dimension_numbers = #tpu.dot_dimension_numbers<[1], [0], [0], [1], [0, 0, 1, 1], [], []>} : vector<32x128xf32>, vector<128x128xf32>, vector<32x128xf32> -> vector<32x128xf32>
    %c0_18 = arith.constant 0 : index
    %c0_19 = arith.constant 0 : index
    %21 = vector.load %arg9[%c0_18, %c0_19] : memref<1x128xf32, #tpu.memory_space<vmem>>, vector<1x128xf32>
    %22 = vector.broadcast %21 : vector<1x128xf32> to vector<32x128xf32>
    %23 = arith.addf %20, %22 : vector<32x128xf32>
    %24 = math.tanh %23 : vector<32x128xf32>
    %c0_20 = arith.constant 0 : index
    %c0_21 = arith.constant 0 : index
    %25 = vector.load %arg10[%c0_20, %c0_21] : memref<128x128xf32, #tpu.memory_space<vmem>>, vector<128x128xf32>
    %cst_22 = arith.constant dense<0.000000e+00> : vector<32x128xf32>
    %26 = tpu.matmul %24, %25, %cst_22 {dimension_numbers = #tpu.dot_dimension_numbers<[1], [0], [0], [1], [0, 0, 1, 1], [], []>} : vector<32x128xf32>, vector<128x128xf32>, vector<32x128xf32> -> vector<32x128xf32>
    %c0_23 = arith.constant 0 : index
    %c0_24 = arith.constant 0 : index
    %27 = vector.load %arg11[%c0_23, %c0_24] : memref<1x128xf32, #tpu.memory_space<vmem>>, vector<1x128xf32>
    %28 = vector.broadcast %27 : vector<1x128xf32> to vector<32x128xf32>
    %29 = arith.addf %26, %28 : vector<32x128xf32>
    %30 = arith.negf %29 : vector<32x128xf32>
    %31 = math.exp %30 : vector<32x128xf32>
    %cst_25 = arith.constant 1.000000e+00 : f32
    %32 = vector.broadcast %cst_25 : f32 to vector<32x128xf32>
    %33 = arith.addf %32, %31 : vector<32x128xf32>
    %34 = arith.divf %32, %33 : vector<32x128xf32>
    %c0_26 = arith.constant 0 : index
    %c0_27 = arith.constant 0 : index
    %35 = vector.load %arg12[%c0_26, %c0_27] : memref<32x128xf32, #tpu.memory_space<vmem>>, vector<32x128xf32>
    tpu.vector_store %arg12[%c0_26, %c0_27], %34 {strides = array<i32>} : memref<32x128xf32, #tpu.memory_space<vmem>>, vector<32x128xf32>,
    return
  }
  func.func @transform_0(%arg0: i32) -> (i32, i32) {
    %c0_i32 = arith.constant 0 : i32
    %c0_i32_0 = arith.constant 0 : i32
    return %arg0, %c0_i32 : i32, i32
  }
  func.func @transform_1(%arg0: i32) -> (i32, i32) {
    %c0_i32 = arith.constant 0 : i32
    %c0_i32_0 = arith.constant 0 : i32
    %c0_i32_1 = arith.constant 0 : i32
    return %c0_i32, %c0_i32_0 : i32, i32
  }
  func.func @transform_2(%arg0: i32) -> (i32, i32) {
    %c0_i32 = arith.constant 0 : i32
    %c0_i32_0 = arith.constant 0 : i32
    %c0_i32_1 = arith.constant 0 : i32
    return %c0_i32, %c0_i32_0 : i32, i32
  }
  func.func @transform_3(%arg0: i32) -> (i32, i32) {
    %c0_i32 = arith.constant 0 : i32
    %c0_i32_0 = arith.constant 0 : i32
    %c0_i32_1 = arith.constant 0 : i32
    return %c0_i32, %c0_i32_0 : i32, i32
  }
  func.func @transform_4(%arg0: i32) -> (i32, i32) {
    %c0_i32 = arith.constant 0 : i32
    %c0_i32_0 = arith.constant 0 : i32
    %c0_i32_1 = arith.constant 0 : i32
    return %c0_i32, %c0_i32_0 : i32, i32
  }
  func.func @transform_5(%arg0: i32) -> (i32, i32) {
    %c0_i32 = arith.constant 0 : i32
    %c0_i32_0 = arith.constant 0 : i32
    %c0_i32_1 = arith.constant 0 : i32
    return %c0_i32, %c0_i32_0 : i32, i32
  }
  func.func @transform_6(%arg0: i32) -> (i32, i32) {
    %c0_i32 = arith.constant 0 : i32
    %c0_i32_0 = arith.constant 0 : i32
    %c0_i32_1 = arith.constant 0 : i32
    return %c0_i32, %c0_i32_0 : i32, i32
  }
  func.func @transform_7(%arg0: i32) -> (i32, i32) {
    %c0_i32 = arith.constant 0 : i32
    %c0_i32_0 = arith.constant 0 : i32
    %c0_i32_1 = arith.constant 0 : i32
    return %c0_i32, %c0_i32_0 : i32, i32
  }
  func.func @transform_8(%arg0: i32) -> (i32, i32) {
    %c0_i32 = arith.constant 0 : i32
    %c0_i32_0 = arith.constant 0 : i32
    %c0_i32_1 = arith.constant 0 : i32
    return %c0_i32, %c0_i32_0 : i32, i32
  }
  func.func @transform_9(%arg0: i32) -> (i32, i32) {
    %c0_i32 = arith.constant 0 : i32
    %c0_i32_0 = arith.constant 0 : i32
    %c0_i32_1 = arith.constant 0 : i32
    return %c0_i32, %c0_i32_0 : i32, i32
  }
  func.func @transform_10(%arg0: i32) -> (i32, i32) {
    %c0_i32 = arith.constant 0 : i32
    %c0_i32_0 = arith.constant 0 : i32
    %c0_i32_1 = arith.constant 0 : i32
    return %c0_i32, %c0_i32_0 : i32, i32
  }
  func.func @transform_11(%arg0: i32) -> (i32, i32) {
    %c0_i32 = arith.constant 0 : i32
    %c0_i32_0 = arith.constant 0 : i32
    return %arg0, %c0_i32 : i32, i32
  }
}

</mosaic_0001>

<llo_original>
// kernel: tpu_custom_call.1
$region0: #{tpu_custom_call.1}
  #allocation0 [shape = 'u32[]', space=smem, size = 0x4, offset = 0x4, fixed_abs, tag = 'smem constant byte address 0x4 - core index']
  #allocation1 [shape = 'u32[144,128]{1,0:T(1,128)}', space=vmem, size = 0x12000, scoped, tag = 'internal scratch']
  %s0 = inlined_call_operand.hbm [shape: f32[32,32], index: 0, kind: input, shape index: {}]
  %s1 = inlined_call_operand.hbm [shape: f32[32,128], index: 1, kind: input, shape index: {}]
  %s2 = inlined_call_operand.vmem [shape: f32[1,128], index: 2, kind: input, shape index: {}]
  %s3 = inlined_call_operand.hbm [shape: f32[128,128], index: 3, kind: input, shape index: {}]
  %s4 = inlined_call_operand.vmem [shape: f32[1,128], index: 4, kind: input, shape index: {}]
  %s5 = inlined_call_operand.hbm [shape: f32[128,128], index: 5, kind: input, shape index: {}]
  %s6 = inlined_call_operand.vmem [shape: f32[1,128], index: 6, kind: input, shape index: {}]
  %s7 = inlined_call_operand.hbm [shape: f32[128,128], index: 7, kind: input, shape index: {}]
  %s8 = inlined_call_operand.vmem [shape: f32[1,128], index: 8, kind: input, shape index: {}]
  %s9 = inlined_call_operand.hbm [shape: f32[128,128], index: 9, kind: input, shape index: {}]
  %s10 = inlined_call_operand.vmem [shape: f32[1,128], index: 10, kind: input, shape index: {}]
  %s11 = inlined_call_operand.hbm [shape: f32[32,128], index: 11, kind: output, shape index: {}]
  %s12 = sld [smem:[#allocation0]]
  $region78: #{tpu_custom_call.1} parent=0
    _
  %s14 = ssub.s32 1, %s12
  %s15 = scalar_select 0, %s14, %s12
  $region1: #{tpu_custom_call.1} parent=0
    #allocation2 [shape = 'u8[16384]{0}', space=vmem, size = 0x4000, scoped, tag = 'input window, operand 0, single buffered']
    #allocation3 [shape = 's32[1]{0}', space=sflag, size = 0x4, scoped, tag = 'scoped memory for tpu_custom_call.1']
    #allocation4 [shape = 's32[1]{0}', space=sflag, size = 0x4, scoped, tag = 'scoped memory for tpu_custom_call.1']
    #allocation5 [shape = 'u8[16384]{0}', space=vmem, size = 0x4000, scoped, tag = 'input window, operand 1, single buffered']
    #allocation6 [shape = 's32[1]{0}', space=sflag, size = 0x4, scoped, tag = 'scoped memory for tpu_custom_call.1']
    #allocation7 [shape = 'u8[65536]{0}', space=vmem, size = 0x10000, scoped, tag = 'input window, operand 3, single buffered']
    #allocation8 [shape = 'u8[65536]{0}', space=vmem, size = 0x10000, scoped, tag = 'input window, operand 5, single buffered']
    #allocation9 [shape = 's32[1]{0}', space=sflag, size = 0x4, scoped, tag = 'scoped memory for tpu_custom_call.1']
    #allocation10 [shape = 'u8[65536]{0}', space=vmem, size = 0x10000, scoped, tag = 'input window, operand 7, single buffered']
    #allocation11 [shape = 'u8[65536]{0}', space=vmem, size = 0x10000, scoped, tag = 'input window, operand 9, single buffered']
    #allocation12 [shape = 's32[1]{0}', space=sflag, size = 0x4, scoped, tag = 'scoped memory for tpu_custom_call.1']
    #allocation13 [shape = 'u8[16384]{0}', space=vmem, size = 0x4000, scoped, tag = 'output window, operand 0, single buffered']
    %16 = vsyncpa [#allocation3], 0
    %17 = vsyncpa [#allocation6], 0
    %18 = vsyncpa [#allocation9], 0
    %19 = vsyncpa [#allocation12], 0
    %20 = vsyncpa [#allocation4], 0
    // Predicated region
    $region2: #{tpu_custom_call.1} parent=1 // pred_check
      _
    $region3: #{tpu_custom_call.1} parent=1 // pred_check_branch
      %22 = sbr.rel (0) target = $region5
    $region4: #{tpu_custom_call.1} parent=1 // pred_region
      %s24 = ssub.s32 512, 512
      %25 = vsyncadd [#allocation3], %s24
      %s26 = sshll.u32 [#allocation2], 4
      %s27 = int_to_ptr.vmem [resolvable:$true] %s26
      %32 = dma.hbm_to_vmem [thread:$0]  %s0, 512, %s27, [#allocation3], 128, 128, 8
    $region5: #{tpu_custom_call.1} parent=1 // pred_fallthru
      _
    // Predicated region
    $region6: #{tpu_custom_call.1} parent=1 // pred_check
      _
    $region7: #{tpu_custom_call.1} parent=1 // pred_check_branch
      %34 = sbr.rel (0) target = $region9
    $region8: #{tpu_custom_call.1} parent=1 // pred_region
      %s36 = ssub.s32 512, 512
      %37 = vsyncadd [#allocation6], %s36
      %s38 = sshll.u32 [#allocation5], 4
      %s39 = int_to_ptr.vmem [resolvable:$true] %s38
      %44 = dma.hbm_to_vmem [thread:$0]  %s1, 512, %s39, [#allocation6], 128, 128, 8
    $region9: #{tpu_custom_call.1} parent=1 // pred_fallthru
      _
    // Predicated region
    $region10: #{tpu_custom_call.1} parent=1 // pred_check
      _
    $region11: #{tpu_custom_call.1} parent=1 // pred_check_branch
      %46 = sbr.rel (0) target = $region13
    $region12: #{tpu_custom_call.1} parent=1 // pred_region
      _
    $region13: #{tpu_custom_call.1} parent=1 // pred_fallthru
      _
    // Predicated region
    $region14: #{tpu_custom_call.1} parent=1 // pred_check
      _
    $region15: #{tpu_custom_call.1} parent=1 // pred_check_branch
      %48 = sbr.rel (0) target = $region17
    $region16: #{tpu_custom_call.1} parent=1 // pred_region
      %s50 = ssub.s32 2048, 2048
      %51 = vsyncadd [#allocation6], %s50
      %s52 = sshll.u32 [#allocation7], 4
      %s53 = int_to_ptr.vmem [resolvable:$true] %s52
      %58 = dma.hbm_to_vmem [thread:$0]  %s3, 2048, %s53, [#allocation6], 128, 128, 8
    $region17: #{tpu_custom_call.1} parent=1 // pred_fallthru
      _
    // Predicated region
    $region18: #{tpu_custom_call.1} parent=1 // pred_check
      _
    $region19: #{tpu_custom_call.1} parent=1 // pred_check_branch
      %60 = sbr.rel (0) target = $region21
    $region20: #{tpu_custom_call.1} parent=1 // pred_region
      _
    $region21: #{tpu_custom_call.1} parent=1 // pred_fallthru
      _
    // Predicated region
    $region22: #{tpu_custom_call.1} parent=1 // pred_check
      _
    $region23: #{tpu_custom_call.1} parent=1 // pred_check_branch
      %62 = sbr.rel (0) target = $region25
    $region24: #{tpu_custom_call.1} parent=1 // pred_region
      %s64 = ssub.s32 2048, 2048
      %65 = vsyncadd [#allocation9], %s64
      %s66 = sshll.u32 [#allocation8], 4
      %s67 = int_to_ptr.vmem [resolvable:$true] %s66
      %72 = dma.hbm_to_vmem [thread:$0]  %s5, 2048, %s67, [#allocation9], 128, 128, 8
    $region25: #{tpu_custom_call.1} parent=1 // pred_fallthru
      _
    // Predicated region
    $region26: #{tpu_custom_call.1} parent=1 // pred_check
      _
    $region27: #{tpu_custom_call.1} parent=1 // pred_check_branch
      %74 = sbr.rel (0) target = $region29
    $region28: #{tpu_custom_call.1} parent=1 // pred_region
      _
    $region29: #{tpu_custom_call.1} parent=1 // pred_fallthru
      _
    // Predicated region
    $region30: #{tpu_custom_call.1} parent=1 // pred_check
      _
    $region31: #{tpu_custom_call.1} parent=1 // pred_check_branch
      %76 = sbr.rel (0) target = $region33
    $region32: #{tpu_custom_call.1} parent=1 // pred_region
      %s78 = ssub.s32 2048, 2048
      %79 = vsyncadd [#allocation9], %s78
      %s80 = sshll.u32 [#allocation10], 4
      %s81 = int_to_ptr.vmem [resolvable:$true] %s80
      %86 = dma.hbm_to_vmem [thread:$0]  %s7, 2048, %s81, [#allocation9], 128, 128, 8
    $region33: #{tpu_custom_call.1} parent=1 // pred_fallthru
      _
    // Predicated region
    $region34: #{tpu_custom_call.1} parent=1 // pred_check
      _
    $region35: #{tpu_custom_call.1} parent=1 // pred_check_branch
      %88 = sbr.rel (0) target = $region37
    $region36: #{tpu_custom_call.1} parent=1 // pred_region
      _
    $region37: #{tpu_custom_call.1} parent=1 // pred_fallthru
      _
    // Predicated region
    $region38: #{tpu_custom_call.1} parent=1 // pred_check
      _
    $region39: #{tpu_custom_call.1} parent=1 // pred_check_branch
      %90 = sbr.rel (0) target = $region41
    $region40: #{tpu_custom_call.1} parent=1 // pred_region
      %s92 = ssub.s32 2048, 2048
      %93 = vsyncadd [#allocation12], %s92
      %s94 = sshll.u32 [#allocation11], 4
      %s95 = int_to_ptr.vmem [resolvable:$true] %s94
      %100 = dma.hbm_to_vmem [thread:$0]  %s9, 2048, %s95, [#allocation12], 128, 128, 8
    $region41: #{tpu_custom_call.1} parent=1 // pred_fallthru
      _
    // Predicated region
    $region42: #{tpu_custom_call.1} parent=1 // pred_check
      _
    $region43: #{tpu_custom_call.1} parent=1 // pred_check_branch
      %102 = sbr.rel (0) target = $region45
    $region44: #{tpu_custom_call.1} parent=1 // pred_region
      _
    $region45: #{tpu_custom_call.1} parent=1 // pred_fallthru
      _
    // Predicated region
    $region46: #{tpu_custom_call.1} parent=1 // pred_check
      _
    $region47: #{tpu_custom_call.1} parent=1 // pred_check_branch
      %104 = sbr.rel (0) target = $region49
    $region48: #{tpu_custom_call.1} parent=1 // pred_region
      %105 = dma.done [#allocation3], 512
    $region49: #{tpu_custom_call.1} parent=1 // pred_fallthru
      _
    // Predicated region
    $region50: #{tpu_custom_call.1} parent=1 // pred_check
      _
    $region51: #{tpu_custom_call.1} parent=1 // pred_check_branch
      %107 = sbr.rel (0) target = $region53
    $region52: #{tpu_custom_call.1} parent=1 // pred_region
      %108 = dma.done [#allocation6], 512
    $region53: #{tpu_custom_call.1} parent=1 // pred_fallthru
      _
    // Predicated region
    $region54: #{tpu_custom_call.1} parent=1 // pred_check
      _
    $region55: #{tpu_custom_call.1} parent=1 // pred_check_branch
      %110 = sbr.rel (0) target = $region57
    $region56: #{tpu_custom_call.1} parent=1 // pred_region
      %111 = dma.done [#allocation6], 2048
    $region57: #{tpu_custom_call.1} parent=1 // pred_fallthru
      _
    // Predicated region
    $region58: #{tpu_custom_call.1} parent=1 // pred_check
      _
    $region59: #{tpu_custom_call.1} parent=1 // pred_check_branch
      %113 = sbr.rel (0) target = $region61
    $region60: #{tpu_custom_call.1} parent=1 // pred_region
      %114 = dma.done [#allocation9], 2048
    $region61: #{tpu_custom_call.1} parent=1 // pred_fallthru
      _
    // Predicated region
    $region62: #{tpu_custom_call.1} parent=1 // pred_check
      _
    $region63: #{tpu_custom_call.1} parent=1 // pred_check_branch
      %116 = sbr.rel (0) target = $region65
    $region64: #{tpu_custom_call.1} parent=1 // pred_region
      %117 = dma.done [#allocation9], 2048
    $region65: #{tpu_custom_call.1} parent=1 // pred_fallthru
      _
    // Predicated region
    $region66: #{tpu_custom_call.1} parent=1 // pred_check
      _
    $region67: #{tpu_custom_call.1} parent=1 // pred_check_branch
      %119 = sbr.rel (0) target = $region69
    $region68: #{tpu_custom_call.1} parent=1 // pred_region
      %120 = dma.done [#allocation12], 2048
    $region69: #{tpu_custom_call.1} parent=1 // pred_fallthru
      _
    %v121 = vld [vmem:[#allocation2] sm:$0xff]
    %v122 = vld [vmem:[#allocation2 + $0x8] sm:$0xff]
    %v123 = vld [vmem:[#allocation2 + $0x10] sm:$0xff]
    %v124 = vld [vmem:[#allocation2 + $0x18] sm:$0xff]
    %v125 = vld [vmem:[#allocation5] sm:$0xff]
    %v126 = vld [vmem:[#allocation5 + $0x8] sm:$0xff]
    %v127 = vld [vmem:[#allocation5 + $0x10] sm:$0xff]
    %v128 = vld [vmem:[#allocation5 + $0x18] sm:$0xff]
    %v129 = vld [vmem:[%s2] sm:$0x1]
    %v131 = vlaneseq
    %v132 = vshrl.u32 %v131, 7
    %v133 = vsub.s32 0, %v132
    %v134 = vrot.slane %v129, %v133
    %vm136 = vcmask 261120
    %v138 = vsel %vm136, %v121, 0
    %v141 = vsel %vm136, %v122, 0
    %v144 = vsel %vm136, %v123, 0
    %v147 = vsel %vm136, %v124, 0
    %149 = vmatprep.subr.mxu0 0.0
    %150 = vmatpush1.msra.mxu0 %v125
    %151 = vmatprep.subr.mxu0 0.0
    %152 = vmatpush1.msra.mxu0 %v126
    %153 = vmatprep.subr.mxu0 0.0
    %154 = vmatpush1.msra.mxu0 %v127
    %155 = vmatprep.subr.mxu0 0.0
    %156 = vmatpush1.msra.mxu0 %v128
    %157 = vmatprep.subr.mxu0 0.0
    %158 = vmatpush1.msra.mxu0 0.0
    %159 = vmatprep.subr.mxu0 0.0
    %160 = vmatpush1.msra.mxu0 0.0
    %161 = vmatprep.subr.mxu0 0.0
    %162 = vmatpush1.msra.mxu0 0.0
    %163 = vmatprep.subr.mxu0 0.0
    %164 = vmatpush1.msra.mxu0 0.0
    %165 = vmatprep.subr.mxu0 0.0
    %166 = vmatpush1.msra.mxu0 0.0
    %167 = vmatprep.subr.mxu0 0.0
    %168 = vmatpush1.msra.mxu0 0.0
    %169 = vmatprep.subr.mxu0 0.0
    %170 = vmatpush1.msra.mxu0 0.0
    %171 = vmatprep.subr.mxu0 0.0
    %172 = vmatpush1.msra.mxu0 0.0
    %173 = vmatprep.subr.mxu0 0.0
    %174 = vmatpush1.msra.mxu0 0.0
    %175 = vmatprep.subr.mxu0 0.0
    %176 = vmatpush1.msra.mxu0 0.0
    %177 = vmatprep.subr.mxu0 0.0
    %178 = vmatpush1.msra.mxu0 0.0
    %179 = vmatprep.subr.mxu0 0.0
    %180 = vmatpush1.msra.mxu0 0.0
    %181 = vmatprep.subr.mxu0 0.0
    %182 = vmatpush1.msra.mxu0 0.0
    %183 = vmatprep.subr.mxu0 0.0
    %184 = vmatpush1.msra.mxu0 0.0
    %185 = vmatprep.subr.mxu0 0.0
    %186 = vmatpush1.msra.mxu0 0.0
    %187 = vmatprep.subr.mxu0 0.0
    %188 = vmatpush1.msra.mxu0 0.0
    %189 = vmatprep.subr.mxu0 0.0
    %190 = vmatpush1.msra.mxu0 0.0
    %191 = vmatprep.subr.mxu0 0.0
    %192 = vmatpush1.msra.mxu0 0.0
    %193 = vmatprep.subr.mxu0 0.0
    %194 = vmatpush1.msra.mxu0 0.0
    %195 = vmatprep.subr.mxu0 0.0
    %196 = vmatpush1.msra.mxu0 0.0
    %197 = vmatprep.subr.mxu0 0.0
    %198 = vmatpush1.msra.mxu0 0.0
    %199 = vmatprep.subr.mxu0 0.0
    %200 = vmatpush1.msra.mxu0 0.0
    %201 = vmatprep.subr.mxu0 0.0
    %202 = vmatpush1.msra.mxu0 0.0
    %203 = vmatprep.subr.mxu0 0.0
    %204 = vmatpush1.msra.mxu0 0.0
    %205 = vmatprep.subr.mxu0 0.0
    %206 = vmatpush1.msra.mxu0 0.0
    %207 = vmatprep.subr.mxu0 0.0
    %208 = vmatpush1.msra.mxu0 0.0
    %209 = vmatprep.subr.mxu0 0.0
    %210 = vmatpush1.msra.mxu0 0.0
    %211 = vmatprep.subr.mxu0 0.0
    %212 = vmatpush1.msra.mxu0 0.0
    %213 = vmatprep.mubr.f32.mxu0 0.0
    %214 = vmatmul.mubr.f32.gmra.mrb[0].mxu0 %v138
    %v215 = vpop.f32.mrb[0].mxu0
    %v216 = vadd.f32 %v134, %v215
    %v217 = vpop.f32.mrb[0].mxu0
    %218 = vmatprep.mubr.f32.mxu0 0.0
    %219 = vmatmul.mubr.f32.gmra.mrb[0].mxu0 %v141
    %v220 = vpop.f32.mrb[0].mxu0
    %v221 = vadd.f32 %v134, %v220
    %v222 = vpop.f32.mrb[0].mxu0
    %223 = vmatprep.mubr.f32.mxu0 0.0
    %224 = vmatmul.mubr.f32.gmra.mrb[0].mxu0 %v144
    %v225 = vpop.f32.mrb[0].mxu0
    %v226 = vadd.f32 %v134, %v225
    %v227 = vpop.f32.mrb[0].mxu0
    %228 = vmatprep.mubr.f32.mxu0 0.0
    %229 = vmatmul.mubr.f32.gmra.mrb[0].mxu0 %v147
    %v230 = vpop.f32.mrb[0].mxu0
    %v231 = vadd.f32 %v134, %v230
    %v232 = vpop.f32.mrb[0].mxu0
    %233 = vdwg.mxu0
    %v234 = vtanh.pop %v216
    %v235 = vtanh.pop %v221
    %v236 = vtanh.pop %v226
    %v237 = vtanh.pop %v231
    %v238 = vld [vmem:[#allocation7] sm:$0xff]
    %v239 = vld [vmem:[#allocation7 + $0x8] sm:$0xff]
    %v240 = vld [vmem:[#allocation7 + $0x10] sm:$0xff]
    %v241 = vld [vmem:[#allocation7 + $0x18] sm:$0xff]
    %v242 = vld [vmem:[#allocation7 + $0x20] sm:$0xff]
    %v243 = vld [vmem:[#allocation7 + $0x28] sm:$0xff]
    %v244 = vld [vmem:[#allocation7 + $0x30] sm:$0xff]
    %v245 = vld [vmem:[#allocation7 + $0x38] sm:$0xff]
    %v246 = vld [vmem:[#allocation7 + $0x40] sm:$0xff]
    %v247 = vld [vmem:[#allocation7 + $0x48] sm:$0xff]
    %v248 = vld [vmem:[#allocation7 + $0x50] sm:$0xff]
    %v249 = vld [vmem:[#allocation7 + $0x58] sm:$0xff]
    %v250 = vld [vmem:[#allocation7 + $0x60] sm:$0xff]
    %v251 = vld [vmem:[#allocation7 + $0x68] sm:$0xff]
    %v252 = vld [vmem:[#allocation7 + $0x70] sm:$0xff]
    %v253 = vld [vmem:[#allocation7 + $0x78] sm:$0xff]
    %v254 = vld [vmem:[%s4] sm:$0x1]
    %v256 = vlaneseq
    %v257 = vshrl.u32 %v256, 7
    %v258 = vsub.s32 0, %v257
    %v259 = vrot.slane %v254, %v258
    %261 = vmatprep.subr.mxu0 0.0
    %262 = vmatpush1.msra.mxu0 %v238
    %263 = vmatprep.subr.mxu0 0.0
    %264 = vmatpush1.msra.mxu0 %v239
    %265 = vmatprep.subr.mxu0 0.0
    %266 = vmatpush1.msra.mxu0 %v240
    %267 = vmatprep.subr.mxu0 0.0
    %268 = vmatpush1.msra.mxu0 %v241
    %269 = vmatprep.subr.mxu0 0.0
    %270 = vmatpush1.msra.mxu0 %v242
    %271 = vmatprep.subr.mxu0 0.0
    %272 = vmatpush1.msra.mxu0 %v243
    %273 = vmatprep.subr.mxu0 0.0
    %274 = vmatpush1.msra.mxu0 %v244
    %275 = vmatprep.subr.mxu0 0.0
    %276 = vmatpush1.msra.mxu0 %v245
    %277 = vmatprep.subr.mxu0 0.0
    %278 = vmatpush1.msra.mxu0 %v246
    %279 = vmatprep.subr.mxu0 0.0
    %280 = vmatpush1.msra.mxu0 %v247
    %281 = vmatprep.subr.mxu0 0.0
    %282 = vmatpush1.msra.mxu0 %v248
    %283 = vmatprep.subr.mxu0 0.0
    %284 = vmatpush1.msra.mxu0 %v249
    %285 = vmatprep.subr.mxu0 0.0
    %286 = vmatpush1.msra.mxu0 %v250
    %287 = vmatprep.subr.mxu0 0.0
    %288 = vmatpush1.msra.mxu0 %v251
    %289 = vmatprep.subr.mxu0 0.0
    %290 = vmatpush1.msra.mxu0 %v252
    %291 = vmatprep.subr.mxu0 0.0
    %292 = vmatpush1.msra.mxu0 %v253
    %293 = vmatprep.subr.mxu0 0.0
    %294 = vmatpush1.msra.mxu0 0.0
    %295 = vmatprep.subr.mxu0 0.0
    %296 = vmatpush1.msra.mxu0 0.0
    %297 = vmatprep.subr.mxu0 0.0
    %298 = vmatpush1.msra.mxu0 0.0
    %299 = vmatprep.subr.mxu0 0.0
    %300 = vmatpush1.msra.mxu0 0.0
    %301 = vmatprep.subr.mxu0 0.0
    %302 = vmatpush1.msra.mxu0 0.0
    %303 = vmatprep.subr.mxu0 0.0
    %304 = vmatpush1.msra.mxu0 0.0
    %305 = vmatprep.subr.mxu0 0.0
    %306 = vmatpush1.msra.mxu0 0.0
    %307 = vmatprep.subr.mxu0 0.0
    %308 = vmatpush1.msra.mxu0 0.0
    %309 = vmatprep.subr.mxu0 0.0
    %310 = vmatpush1.msra.mxu0 0.0
    %311 = vmatprep.subr.mxu0 0.0
    %312 = vmatpush1.msra.mxu0 0.0
    %313 = vmatprep.subr.mxu0 0.0
    %314 = vmatpush1.msra.mxu0 0.0
    %315 = vmatprep.subr.mxu0 0.0
    %316 = vmatpush1.msra.mxu0 0.0
    %317 = vmatprep.subr.mxu0 0.0
    %318 = vmatpush1.msra.mxu0 0.0
    %319 = vmatprep.subr.mxu0 0.0
    %320 = vmatpush1.msra.mxu0 0.0
    %321 = vmatprep.subr.mxu0 0.0
    %322 = vmatpush1.msra.mxu0 0.0
    %323 = vmatprep.subr.mxu0 0.0
    %324 = vmatpush1.msra.mxu0 0.0
    %325 = vmatprep.mubr.f32.mxu0 0.0
    %326 = vmatmul.mubr.f32.gmra.mrb[0].mxu0 %v234
    %v327 = vpop.f32.mrb[0].mxu0
    %v328 = vadd.f32 %v259, %v327
    %v329 = vpop.f32.mrb[0].mxu0
    %330 = vmatprep.mubr.f32.mxu0 0.0
    %331 = vmatmul.mubr.f32.gmra.mrb[0].mxu0 %v235
    %v332 = vpop.f32.mrb[0].mxu0
    %v333 = vadd.f32 %v259, %v332
    %v334 = vpop.f32.mrb[0].mxu0
    %335 = vmatprep.mubr.f32.mxu0 0.0
    %336 = vmatmul.mubr.f32.gmra.mrb[0].mxu0 %v236
    %v337 = vpop.f32.mrb[0].mxu0
    %v338 = vadd.f32 %v259, %v337
    %v339 = vpop.f32.mrb[0].mxu0
    %340 = vmatprep.mubr.f32.mxu0 0.0
    %341 = vmatmul.mubr.f32.gmra.mrb[0].mxu0 %v237
    %v342 = vpop.f32.mrb[0].mxu0
    %v343 = vadd.f32 %v259, %v342
    %v344 = vpop.f32.mrb[0].mxu0
    %345 = vdwg.mxu0
    %v346 = vtanh.pop %v328
    %v347 = vtanh.pop %v333
    %v348 = vtanh.pop %v338
    %v349 = vtanh.pop %v343
    %v350 = vld [vmem:[#allocation8] sm:$0xff]
    %v351 = vld [vmem:[#allocation8 + $0x8] sm:$0xff]
    %v352 = vld [vmem:[#allocation8 + $0x10] sm:$0xff]
    %v353 = vld [vmem:[#allocation8 + $0x18] sm:$0xff]
    %v354 = vld [vmem:[#allocation8 + $0x20] sm:$0xff]
    %v355 = vld [vmem:[#allocation8 + $0x28] sm:$0xff]
    %v356 = vld [vmem:[#allocation8 + $0x30] sm:$0xff]
    %v357 = vld [vmem:[#allocation8 + $0x38] sm:$0xff]
    %v358 = vld [vmem:[#allocation8 + $0x40] sm:$0xff]
    %v359 = vld [vmem:[#allocation8 + $0x48] sm:$0xff]
    %v360 = vld [vmem:[#allocation8 + $0x50] sm:$0xff]
    %v361 = vld [vmem:[#allocation8 + $0x58] sm:$0xff]
    %v362 = vld [vmem:[#allocation8 + $0x60] sm:$0xff]
    %v363 = vld [vmem:[#allocation8 + $0x68] sm:$0xff]
    %v364 = vld [vmem:[#allocation8 + $0x70] sm:$0xff]
    %v365 = vld [vmem:[#allocation8 + $0x78] sm:$0xff]
    %v366 = vld [vmem:[%s6] sm:$0x1]
    %v368 = vlaneseq
    %v369 = vshrl.u32 %v368, 7
    %v370 = vsub.s32 0, %v369
    %v371 = vrot.slane %v366, %v370
    %373 = vmatprep.subr.mxu0 0.0
    %374 = vmatpush1.msra.mxu0 %v350
    %375 = vmatprep.subr.mxu0 0.0
    %376 = vmatpush1.msra.mxu0 %v351
    %377 = vmatprep.subr.mxu0 0.0
    %378 = vmatpush1.msra.mxu0 %v352
    %379 = vmatprep.subr.mxu0 0.0
    %380 = vmatpush1.msra.mxu0 %v353
    %381 = vmatprep.subr.mxu0 0.0
    %382 = vmatpush1.msra.mxu0 %v354
    %383 = vmatprep.subr.mxu0 0.0
    %384 = vmatpush1.msra.mxu0 %v355
    %385 = vmatprep.subr.mxu0 0.0
    %386 = vmatpush1.msra.mxu0 %v356
    %387 = vmatprep.subr.mxu0 0.0
    %388 = vmatpush1.msra.mxu0 %v357
    %389 = vmatprep.subr.mxu0 0.0
    %390 = vmatpush1.msra.mxu0 %v358
    %391 = vmatprep.subr.mxu0 0.0
    %392 = vmatpush1.msra.mxu0 %v359
    %393 = vmatprep.subr.mxu0 0.0
    %394 = vmatpush1.msra.mxu0 %v360
    %395 = vmatprep.subr.mxu0 0.0
    %396 = vmatpush1.msra.mxu0 %v361
    %397 = vmatprep.subr.mxu0 0.0
    %398 = vmatpush1.msra.mxu0 %v362
    %399 = vmatprep.subr.mxu0 0.0
    %400 = vmatpush1.msra.mxu0 %v363
    %401 = vmatprep.subr.mxu0 0.0
    %402 = vmatpush1.msra.mxu0 %v364
    %403 = vmatprep.subr.mxu0 0.0
    %404 = vmatpush1.msra.mxu0 %v365
    %405 = vmatprep.subr.mxu0 0.0
    %406 = vmatpush1.msra.mxu0 0.0
    %407 = vmatprep.subr.mxu0 0.0
    %408 = vmatpush1.msra.mxu0 0.0
    %409 = vmatprep.subr.mxu0 0.0
    %410 = vmatpush1.msra.mxu0 0.0
    %411 = vmatprep.subr.mxu0 0.0
    %412 = vmatpush1.msra.mxu0 0.0
    %413 = vmatprep.subr.mxu0 0.0
    %414 = vmatpush1.msra.mxu0 0.0
    %415 = vmatprep.subr.mxu0 0.0
    %416 = vmatpush1.msra.mxu0 0.0
    %417 = vmatprep.subr.mxu0 0.0
    %418 = vmatpush1.msra.mxu0 0.0
    %419 = vmatprep.subr.mxu0 0.0
    %420 = vmatpush1.msra.mxu0 0.0
    %421 = vmatprep.subr.mxu0 0.0
    %422 = vmatpush1.msra.mxu0 0.0
    %423 = vmatprep.subr.mxu0 0.0
    %424 = vmatpush1.msra.mxu0 0.0
    %425 = vmatprep.subr.mxu0 0.0
    %426 = vmatpush1.msra.mxu0 0.0
    %427 = vmatprep.subr.mxu0 0.0
    %428 = vmatpush1.msra.mxu0 0.0
    %429 = vmatprep.subr.mxu0 0.0
    %430 = vmatpush1.msra.mxu0 0.0
    %431 = vmatprep.subr.mxu0 0.0
    %432 = vmatpush1.msra.mxu0 0.0
    %433 = vmatprep.subr.mxu0 0.0
    %434 = vmatpush1.msra.mxu0 0.0
    %435 = vmatprep.subr.mxu0 0.0
    %436 = vmatpush1.msra.mxu0 0.0
    %437 = vmatprep.mubr.f32.mxu0 0.0
    %438 = vmatmul.mubr.f32.gmra.mrb[0].mxu0 %v346
    %v439 = vpop.f32.mrb[0].mxu0
    %v440 = vadd.f32 %v371, %v439
    %v441 = vpop.f32.mrb[0].mxu0
    %442 = vmatprep.mubr.f32.mxu0 0.0
    %443 = vmatmul.mubr.f32.gmra.mrb[0].mxu0 %v347
    %v444 = vpop.f32.mrb[0].mxu0
    %v445 = vadd.f32 %v371, %v444
    %v446 = vpop.f32.mrb[0].mxu0
    %447 = vmatprep.mubr.f32.mxu0 0.0
    %448 = vmatmul.mubr.f32.gmra.mrb[0].mxu0 %v348
    %v449 = vpop.f32.mrb[0].mxu0
    %v450 = vadd.f32 %v371, %v449
    %v451 = vpop.f32.mrb[0].mxu0
    %452 = vmatprep.mubr.f32.mxu0 0.0
    %453 = vmatmul.mubr.f32.gmra.mrb[0].mxu0 %v349
    %v454 = vpop.f32.mrb[0].mxu0
    %v455 = vadd.f32 %v371, %v454
    %v456 = vpop.f32.mrb[0].mxu0
    %457 = vdwg.mxu0
    %v458 = vtanh.pop %v440
    %v459 = vtanh.pop %v445
    %v460 = vtanh.pop %v450
    %v461 = vtanh.pop %v455
    %v462 = vld [vmem:[#allocation10] sm:$0xff]
    %v463 = vld [vmem:[#allocation10 + $0x8] sm:$0xff]
    %v464 = vld [vmem:[#allocation10 + $0x10] sm:$0xff]
    %v465 = vld [vmem:[#allocation10 + $0x18] sm:$0xff]
    %v466 = vld [vmem:[#allocation10 + $0x20] sm:$0xff]
    %v467 = vld [vmem:[#allocation10 + $0x28] sm:$0xff]
    %v468 = vld [vmem:[#allocation10 + $0x30] sm:$0xff]
    %v469 = vld [vmem:[#allocation10 + $0x38] sm:$0xff]
    %v470 = vld [vmem:[#allocation10 + $0x40] sm:$0xff]
    %v471 = vld [vmem:[#allocation10 + $0x48] sm:$0xff]
    %v472 = vld [vmem:[#allocation10 + $0x50] sm:$0xff]
    %v473 = vld [vmem:[#allocation10 + $0x58] sm:$0xff]
    %v474 = vld [vmem:[#allocation10 + $0x60] sm:$0xff]
    %v475 = vld [vmem:[#allocation10 + $0x68] sm:$0xff]
    %v476 = vld [vmem:[#allocation10 + $0x70] sm:$0xff]
    %v477 = vld [vmem:[#allocation10 + $0x78] sm:$0xff]
    %v478 = vld [vmem:[%s8] sm:$0x1]
    %v480 = vlaneseq
    %v481 = vshrl.u32 %v480, 7
    %v482 = vsub.s32 0, %v481
    %v483 = vrot.slane %v478, %v482
    %485 = vmatprep.subr.mxu0 0.0
    %486 = vmatpush1.msra.mxu0 %v462
    %487 = vmatprep.subr.mxu0 0.0
    %488 = vmatpush1.msra.mxu0 %v463
    %489 = vmatprep.subr.mxu0 0.0
    %490 = vmatpush1.msra.mxu0 %v464
    %491 = vmatprep.subr.mxu0 0.0
    %492 = vmatpush1.msra.mxu0 %v465
    %493 = vmatprep.subr.mxu0 0.0
    %494 = vmatpush1.msra.mxu0 %v466
    %495 = vmatprep.subr.mxu0 0.0
    %496 = vmatpush1.msra.mxu0 %v467
    %497 = vmatprep.subr.mxu0 0.0
    %498 = vmatpush1.msra.mxu0 %v468
    %499 = vmatprep.subr.mxu0 0.0
    %500 = vmatpush1.msra.mxu0 %v469
    %501 = vmatprep.subr.mxu0 0.0
    %502 = vmatpush1.msra.mxu0 %v470
    %503 = vmatprep.subr.mxu0 0.0
    %504 = vmatpush1.msra.mxu0 %v471
    %505 = vmatprep.subr.mxu0 0.0
    %506 = vmatpush1.msra.mxu0 %v472
    %507 = vmatprep.subr.mxu0 0.0
    %508 = vmatpush1.msra.mxu0 %v473
    %509 = vmatprep.subr.mxu0 0.0
    %510 = vmatpush1.msra.mxu0 %v474
    %511 = vmatprep.subr.mxu0 0.0
    %512 = vmatpush1.msra.mxu0 %v475
    %513 = vmatprep.subr.mxu0 0.0
    %514 = vmatpush1.msra.mxu0 %v476
    %515 = vmatprep.subr.mxu0 0.0
    %516 = vmatpush1.msra.mxu0 %v477
    %517 = vmatprep.subr.mxu0 0.0
    %518 = vmatpush1.msra.mxu0 0.0
    %519 = vmatprep.subr.mxu0 0.0
    %520 = vmatpush1.msra.mxu0 0.0
    %521 = vmatprep.subr.mxu0 0.0
    %522 = vmatpush1.msra.mxu0 0.0
    %523 = vmatprep.subr.mxu0 0.0
    %524 = vmatpush1.msra.mxu0 0.0
    %525 = vmatprep.subr.mxu0 0.0
    %526 = vmatpush1.msra.mxu0 0.0
    %527 = vmatprep.subr.mxu0 0.0
    %528 = vmatpush1.msra.mxu0 0.0
    %529 = vmatprep.subr.mxu0 0.0
    %530 = vmatpush1.msra.mxu0 0.0
    %531 = vmatprep.subr.mxu0 0.0
    %532 = vmatpush1.msra.mxu0 0.0
    %533 = vmatprep.subr.mxu0 0.0
    %534 = vmatpush1.msra.mxu0 0.0
    %535 = vmatprep.subr.mxu0 0.0
    %536 = vmatpush1.msra.mxu0 0.0
    %537 = vmatprep.subr.mxu0 0.0
    %538 = vmatpush1.msra.mxu0 0.0
    %539 = vmatprep.subr.mxu0 0.0
    %540 = vmatpush1.msra.mxu0 0.0
    %541 = vmatprep.subr.mxu0 0.0
    %542 = vmatpush1.msra.mxu0 0.0
    %543 = vmatprep.subr.mxu0 0.0
    %544 = vmatpush1.msra.mxu0 0.0
    %545 = vmatprep.subr.mxu0 0.0
    %546 = vmatpush1.msra.mxu0 0.0
    %547 = vmatprep.subr.mxu0 0.0
    %548 = vmatpush1.msra.mxu0 0.0
    %549 = vmatprep.mubr.f32.mxu0 0.0
    %550 = vmatmul.mubr.f32.gmra.mrb[0].mxu0 %v458
    %v551 = vpop.f32.mrb[0].mxu0
    %v552 = vadd.f32 %v483, %v551
    %v553 = vpop.f32.mrb[0].mxu0
    %554 = vmatprep.mubr.f32.mxu0 0.0
    %555 = vmatmul.mubr.f32.gmra.mrb[0].mxu0 %v459
    %v556 = vpop.f32.mrb[0].mxu0
    %v557 = vadd.f32 %v483, %v556
    %v558 = vpop.f32.mrb[0].mxu0
    %559 = vmatprep.mubr.f32.mxu0 0.0
    %560 = vmatmul.mubr.f32.gmra.mrb[0].mxu0 %v460
    %v561 = vpop.f32.mrb[0].mxu0
    %v562 = vadd.f32 %v483, %v561
    %v563 = vpop.f32.mrb[0].mxu0
    %564 = vmatprep.mubr.f32.mxu0 0.0
    %565 = vmatmul.mubr.f32.gmra.mrb[0].mxu0 %v461
    %v566 = vpop.f32.mrb[0].mxu0
    %v567 = vadd.f32 %v483, %v566
    %v568 = vpop.f32.mrb[0].mxu0
    %569 = vdwg.mxu0
    %v570 = vtanh.pop %v552
    %v571 = vtanh.pop %v557
    %v572 = vtanh.pop %v562
    %v573 = vtanh.pop %v567
    %v574 = vld [vmem:[#allocation11] sm:$0xff]
    %v575 = vld [vmem:[#allocation11 + $0x8] sm:$0xff]
    %v576 = vld [vmem:[#allocation11 + $0x10] sm:$0xff]
    %v577 = vld [vmem:[#allocation11 + $0x18] sm:$0xff]
    %v578 = vld [vmem:[#allocation11 + $0x20] sm:$0xff]
    %v579 = vld [vmem:[#allocation11 + $0x28] sm:$0xff]
    %v580 = vld [vmem:[#allocation11 + $0x30] sm:$0xff]
    %v581 = vld [vmem:[#allocation11 + $0x38] sm:$0xff]
    %v582 = vld [vmem:[#allocation11 + $0x40] sm:$0xff]
    %v583 = vld [vmem:[#allocation11 + $0x48] sm:$0xff]
    %v584 = vld [vmem:[#allocation11 + $0x50] sm:$0xff]
    %v585 = vld [vmem:[#allocation11 + $0x58] sm:$0xff]
    %v586 = vld [vmem:[#allocation11 + $0x60] sm:$0xff]
    %v587 = vld [vmem:[#allocation11 + $0x68] sm:$0xff]
    %v588 = vld [vmem:[#allocation11 + $0x70] sm:$0xff]
    %v589 = vld [vmem:[#allocation11 + $0x78] sm:$0xff]
    %v590 = vld [vmem:[%s10] sm:$0x1]
    %v592 = vlaneseq
    %v593 = vshrl.u32 %v592, 7
    %v594 = vsub.s32 0, %v593
    %v595 = vrot.slane %v590, %v594
    %597 = vmatprep.subr.mxu0 0.0
    %598 = vmatpush1.msra.mxu0 %v574
    %599 = vmatprep.subr.mxu0 0.0
    %600 = vmatpush1.msra.mxu0 %v575
    %601 = vmatprep.subr.mxu0 0.0
    %602 = vmatpush1.msra.mxu0 %v576
    %603 = vmatprep.subr.mxu0 0.0
    %604 = vmatpush1.msra.mxu0 %v577
    %605 = vmatprep.subr.mxu0 0.0
    %606 = vmatpush1.msra.mxu0 %v578
    %607 = vmatprep.subr.mxu0 0.0
    %608 = vmatpush1.msra.mxu0 %v579
    %609 = vmatprep.subr.mxu0 0.0
    %610 = vmatpush1.msra.mxu0 %v580
    %611 = vmatprep.subr.mxu0 0.0
    %612 = vmatpush1.msra.mxu0 %v581
    %613 = vmatprep.subr.mxu0 0.0
    %614 = vmatpush1.msra.mxu0 %v582
    %615 = vmatprep.subr.mxu0 0.0
    %616 = vmatpush1.msra.mxu0 %v583
    %617 = vmatprep.subr.mxu0 0.0
    %618 = vmatpush1.msra.mxu0 %v584
    %619 = vmatprep.subr.mxu0 0.0
    %620 = vmatpush1.msra.mxu0 %v585
    %621 = vmatprep.subr.mxu0 0.0
    %622 = vmatpush1.msra.mxu0 %v586
    %623 = vmatprep.subr.mxu0 0.0
    %624 = vmatpush1.msra.mxu0 %v587
    %625 = vmatprep.subr.mxu0 0.0
    %626 = vmatpush1.msra.mxu0 %v588
    %627 = vmatprep.subr.mxu0 0.0
    %628 = vmatpush1.msra.mxu0 %v589
    %629 = vmatprep.subr.mxu0 0.0
    %630 = vmatpush1.msra.mxu0 0.0
    %631 = vmatprep.subr.mxu0 0.0
    %632 = vmatpush1.msra.mxu0 0.0
    %633 = vmatprep.subr.mxu0 0.0
    %634 = vmatpush1.msra.mxu0 0.0
    %635 = vmatprep.subr.mxu0 0.0
    %636 = vmatpush1.msra.mxu0 0.0
    %637 = vmatprep.subr.mxu0 0.0
    %638 = vmatpush1.msra.mxu0 0.0
    %639 = vmatprep.subr.mxu0 0.0
    %640 = vmatpush1.msra.mxu0 0.0
    %641 = vmatprep.subr.mxu0 0.0
    %642 = vmatpush1.msra.mxu0 0.0
    %643 = vmatprep.subr.mxu0 0.0
    %644 = vmatpush1.msra.mxu0 0.0
    %645 = vmatprep.subr.mxu0 0.0
    %646 = vmatpush1.msra.mxu0 0.0
    %647 = vmatprep.subr.mxu0 0.0
    %648 = vmatpush1.msra.mxu0 0.0
    %649 = vmatprep.subr.mxu0 0.0
    %650 = vmatpush1.msra.mxu0 0.0
    %651 = vmatprep.subr.mxu0 0.0
    %652 = vmatpush1.msra.mxu0 0.0
    %653 = vmatprep.subr.mxu0 0.0
    %654 = vmatpush1.msra.mxu0 0.0
    %655 = vmatprep.subr.mxu0 0.0
    %656 = vmatpush1.msra.mxu0 0.0
    %657 = vmatprep.subr.mxu0 0.0
    %658 = vmatpush1.msra.mxu0 0.0
    %659 = vmatprep.subr.mxu0 0.0
    %660 = vmatpush1.msra.mxu0 0.0
    %661 = vmatprep.mubr.f32.mxu0 0.0
    %662 = vmatmul.mubr.f32.gmra.mrb[0].mxu0 %v570
    %v663 = vpop.f32.mrb[0].mxu0
    %v664 = vadd.f32 %v595, %v663
    %v665 = vpop.f32.mrb[0].mxu0
    %666 = vmatprep.mubr.f32.mxu0 0.0
    %667 = vmatmul.mubr.f32.gmra.mrb[0].mxu0 %v571
    %v668 = vpop.f32.mrb[0].mxu0
    %v669 = vadd.f32 %v595, %v668
    %v670 = vpop.f32.mrb[0].mxu0
    %671 = vmatprep.mubr.f32.mxu0 0.0
    %672 = vmatmul.mubr.f32.gmra.mrb[0].mxu0 %v572
    %v673 = vpop.f32.mrb[0].mxu0
    %v674 = vadd.f32 %v595, %v673
    %v675 = vpop.f32.mrb[0].mxu0
    %676 = vmatprep.mubr.f32.mxu0 0.0
    %677 = vmatmul.mubr.f32.gmra.mrb[0].mxu0 %v573
    %v678 = vpop.f32.mrb[0].mxu0
    %v679 = vadd.f32 %v595, %v678
    %v680 = vpop.f32.mrb[0].mxu0
    %681 = vdwg.mxu0
    %v682 = vxor.u32 %v664, 2147483648
    %v683 = vxor.u32 %v669, 2147483648
    %v684 = vxor.u32 %v674, 2147483648
    %v685 = vxor.u32 %v679, 2147483648
    %v686 = vmul.f32 %v682, 1.442695
    %v687 = vpow.pop %v686
    %v688 = vmul.f32 %v683, 1.442695
    %v689 = vpow.pop %v688
    %v690 = vmul.f32 %v684, 1.442695
    %v691 = vpow.pop %v690
    %v692 = vmul.f32 %v685, 1.442695
    %v693 = vpow.pop %v692
    %v694 = vadd.f32 %v687, 1.0
    %v695 = vadd.f32 %v689, 1.0
    %v696 = vadd.f32 %v691, 1.0
    %v697 = vadd.f32 %v693, 1.0
    %v698 = vrcp.pop %v694
    %v699 = vmul.f32 1.0, %v698
    %v700 = vrcp.pop %v695
    %v701 = vmul.f32 1.0, %v700
    %v702 = vrcp.pop %v696
    %v703 = vmul.f32 1.0, %v702
    %v704 = vrcp.pop %v697
    %v705 = vmul.f32 1.0, %v704
    %706 = vst [vmem:[#allocation13] sm:$0xff] %v699
    %707 = vst [vmem:[#allocation13 + $0x8] sm:$0xff] %v701
    %708 = vst [vmem:[#allocation13 + $0x10] sm:$0xff] %v703
    %709 = vst [vmem:[#allocation13 + $0x18] sm:$0xff] %v705
    // Predicated region
    $region70: #{tpu_custom_call.1} parent=1 // pred_check
      _
    $region71: #{tpu_custom_call.1} parent=1 // pred_check_branch
      %711 = sbr.rel (0) target = $region73
    $region72: #{tpu_custom_call.1} parent=1 // pred_region
      %s713 = ssub.s32 512, 512
      %714 = vsyncadd [#allocation4], %s713
      %s715 = sshll.u32 [#allocation13], 4
      %s716 = int_to_ptr.vmem [resolvable:$true] %s715
      %721 = dma.vmem_to_hbm [thread:$0]  %s716, 512, %s11, [#allocation4], 128, 128, 8
    $region73: #{tpu_custom_call.1} parent=1 // pred_fallthru
      _
    // Predicated region
    $region74: #{tpu_custom_call.1} parent=1 // pred_check
      _
    $region75: #{tpu_custom_call.1} parent=1 // pred_check_branch
      %723 = sbr.rel (0) target = $region77
    $region76: #{tpu_custom_call.1} parent=1 // pred_region
      %724 = dma.done [#allocation4], 512
    $region77: #{tpu_custom_call.1} parent=1 // pred_fallthru
      _
    %725 = vsyncpa [#allocation3], 1
    %726 = vsyncpa [#allocation6], 1
    %727 = vsyncpa [#allocation9], 1
    %728 = vsyncpa [#allocation12], 1
    %729 = vsyncpa [#allocation4], 1

</llo_original>
